<compile_context>
chip_gen: v7x
topology: tpu7x:2x2x1
jax: 0.10.0
libtpu: 0.0.40
codegen_flags: <defaults>
</compile_context>

<pallas_src>
import jax
import jax.numpy as jnp
from jax.experimental import pallas as pl
from jax.experimental.pallas import tpu as pltpu

_LANE = 128
_SUBLANE = 8


def _time2vec_kernel(sb_ref, t_ref, o_ref):
    """One grid step of the fused Time2Vec chain.

    sb_ref: SMEM (2, k) f32 -- row 0: scales, row 1: biases
    t_ref : VMEM (tile_rows, C) block of `times` (original HBM dtype)
    o_ref : VMEM (k+1, tile_rows, C) output block (original HBM dtype)
    """
    k = o_ref.shape[0] - 1
    # Upcast once in-register; compute stays in f32 vregs (free vs. HBM cost,
    # and v5e's VPU/EUP has no bf16 path anyway).
    cur = t_ref[...].astype(jnp.float32)
    o_ref[0] = cur.astype(o_ref.dtype)            # channel 0: identity copy
    for i in range(k):                            # k is small & static -> unrolled
        nxt = jnp.sin(cur * sb_ref[0, i] + sb_ref[1, i]).astype(o_ref.dtype)
        o_ref[i + 1] = nxt
        # Chain through the stored-precision value (matches the PyTorch module,
        # where each activation consumes the previous *materialized* tensor).
        cur = nxt.astype(jnp.float32)


def _choose_tiling(n, k, itemsize):
    """Pick a lane-dense (rows, C) view and a row-tile size."""
    # Wider rows -> longer unmasked store/DMA bursts (store-side lever).
    C = 1024 if n >= 1024 * _SUBLANE else _LANE
    rows = pl.cdiv(n, C)
    rows = pl.cdiv(rows, _SUBLANE) * _SUBLANE           # sublane-align

    # Target ~2 MiB of HBM traffic per grid step (input block + (k+1) output
    # blocks). Double-buffered VMEM = 2x that (~4 MiB): well under the 16 MiB
    # v5e scoped default and the 64 MiB physical VMEM on v7x, while large
    # enough to sit near the HBM roofline (>= ~85% measured on v6e).
    per_step_bytes = 2 << 20
    target_elems = max(_SUBLANE * C, per_step_bytes // ((k + 2) * itemsize))
    target_rows = max(_SUBLANE, (target_elems // C) // _SUBLANE * _SUBLANE)

    grid_steps = pl.cdiv(rows, target_rows)
    tile_rows = pl.cdiv(rows, grid_steps)
    tile_rows = pl.cdiv(tile_rows, _SUBLANE) * _SUBLANE
    rows_padded = grid_steps * tile_rows
    return C, rows_padded, tile_rows, grid_steps


def time2vec(times, scales, biases):
    """Time2Vec forward: returns array of shape times.shape + (k+1,)."""
    scales = jnp.asarray(scales, jnp.float32).reshape(-1)
    biases = jnp.asarray(biases, jnp.float32).reshape(-1)
    k = int(scales.shape[0])
    orig_shape = times.shape

    if k == 0:  # matches `times.unsqueeze(-1)` in the PyTorch module
        return times[..., None]

    # Keep the HBM-resident dtype (bf16 stays bf16); only guard non-floats.
    if not jnp.issubdtype(times.dtype, jnp.floating):
        times = times.astype(jnp.float32)
    out_dtype = times.dtype
    itemsize = jnp.dtype(out_dtype).itemsize

    flat = times.reshape(-1)
    n = flat.shape[0]
    C, rows, tile_rows, grid_steps = _choose_tiling(n, k, itemsize)

    padded_n = rows * C
    if padded_n != n:  # pad only when strictly needed (single extra pass)
        flat = jnp.pad(flat, (0, padded_n - n))
    x2d = flat.reshape(rows, C)

    # Scalar parameters -> SMEM: (2, k) f32 = [scales; biases].
    sb = jnp.stack([scales, biases])

    total_elems = rows * C
    cost = pl.CostEstimate(
        flops=2 * total_elems * k,
        transcendentals=total_elems * k,
        bytes_accessed=total_elems * itemsize * (k + 2),
    )

    out3 = pl.pallas_call(
        _time2vec_kernel,
        out_shape=jax.ShapeDtypeStruct((k + 1, rows, C), out_dtype),
        grid=(grid_steps,),
        in_specs=[
            pl.BlockSpec(memory_space=pltpu.SMEM),            # (2, k) scale/bias scalars
            pl.BlockSpec((tile_rows, C), lambda i: (i, 0)),    # times block (orig dtype)
        ],
        out_specs=pl.BlockSpec((k + 1, tile_rows, C), lambda i: (0, i, 0)),
        compiler_params=pltpu.CompilerParams(
            dimension_semantics=("parallel",),
        ),
        cost_estimate=cost,
    )(sb, x2d)

    # Layout plumbing only: drop pad, then put the channel axis last
    # (torch.stack(outputs, dim=-1)).
    out = out3.reshape(k + 1, padded_n)
    if padded_n != n:
        out = out[:, :n]
    out = jnp.moveaxis(out.reshape((k + 1,) + orig_shape), 0, -1)
    return out


if __name__ == "__main__":
    key = jax.random.PRNGKey(0)
    kt, kp = jax.random.split(key)

    k = 3
    times = jax.random.normal(kt, (2, 8), dtype=jnp.float32)    # (batch, seq)
    params = jax.random.normal(kp, (2, k), dtype=jnp.float32)   # torch.randn(1) analog per act
    scales, biases = params[0], params[1]

    out = time2vec(times, scales, biases)
    out = jax.block_until_ready(out)

    # Pure-JAX reference of the Time2Vec forward.
    ref_outs = [times]
    for i in range(k):
        ref_outs.append(jnp.sin(ref_outs[-1] * scales[i] + biases[i]))
    ref = jnp.stack(ref_outs, axis=-1)

    assert out.shape == times.shape + (k + 1,)
    assert jnp.allclose(out, ref, atol=1e-5, rtol=1e-5), float(jnp.max(jnp.abs(out - ref)))

    # k == 0 path (pure indexing, no kernel) matches times.unsqueeze(-1).
    out0 = time2vec(times, jnp.zeros((0,), jnp.float32), jnp.zeros((0,), jnp.float32))
    assert out0.shape == times.shape + (1,)
    assert jnp.allclose(out0[..., 0], times)

    print("KERNEL_OK")
</pallas_src>

<mosaic_0001>
module attributes {stable_mosaic.version = 11 : i64} {
  func.func @_time2vec_kernel(%arg0: i32, %arg1: memref<2x3xf32, #tpu.memory_space<smem>>, %arg2: memref<8x128xf32, #tpu.memory_space<vmem>>, %arg3: memref<4x8x128xf32, #tpu.memory_space<vmem>>) attributes {dimension_semantics = [#tpu.dimension_semantics<parallel>], iteration_bounds = array<i64: 1>, scalar_prefetch = 0 : i64, scratch_operands = 0 : i64, tpu.core_type = #tpu.core_type<tc>, window_params = [{transform_indices = @transform_0, window_bounds = array<i64: 2, 3>}, {transform_indices = @transform_1, window_bounds = array<i64: 8, 128>}, {transform_indices = @transform_2, window_bounds = array<i64: 4, 8, 128>}]} {
    %c0 = arith.constant 0 : index
    %c0_0 = arith.constant 0 : index
    %0 = vector.load %arg2[%c0, %c0_0] : memref<8x128xf32, #tpu.memory_space<vmem>>, vector<8x128xf32>
    %c0_1 = arith.constant 0 : index
    %c0_2 = arith.constant 0 : index
    %c0_3 = arith.constant 0 : index
    %1 = vector.load %arg3[%c0_1, %c0_2, %c0_3] : memref<4x8x128xf32, #tpu.memory_space<vmem>>, vector<1x8x128xf32>
    %2 = vector.shape_cast %1 : vector<1x8x128xf32> to vector<8x128xf32>
    %3 = vector.shape_cast %0 : vector<8x128xf32> to vector<1x8x128xf32>
    tpu.vector_store %arg3[%c0_1, %c0_2, %c0_3], %3 {strides = array<i32>} : memref<4x8x128xf32, #tpu.memory_space<vmem>>, vector<1x8x128xf32>,
    %c0_4 = arith.constant 0 : index
    %c0_5 = arith.constant 0 : index
    %4 = memref.load %arg1[%c0_4, %c0_5] : memref<2x3xf32, #tpu.memory_space<smem>>
    %5 = vector.broadcast %4 : f32 to vector<8x128xf32>
    %6 = arith.mulf %0, %5 : vector<8x128xf32>
    %c1 = arith.constant 1 : index
    %c0_6 = arith.constant 0 : index
    %7 = memref.load %arg1[%c1, %c0_6] : memref<2x3xf32, #tpu.memory_space<smem>>
    %8 = vector.broadcast %7 : f32 to vector<8x128xf32>
    %9 = arith.addf %6, %8 : vector<8x128xf32>
    %10 = math.sin %9 : vector<8x128xf32>
    %c1_7 = arith.constant 1 : index
    %c0_8 = arith.constant 0 : index
    %c0_9 = arith.constant 0 : index
    %11 = vector.load %arg3[%c1_7, %c0_8, %c0_9] : memref<4x8x128xf32, #tpu.memory_space<vmem>>, vector<1x8x128xf32>
    %12 = vector.shape_cast %11 : vector<1x8x128xf32> to vector<8x128xf32>
    %13 = vector.shape_cast %10 : vector<8x128xf32> to vector<1x8x128xf32>
    tpu.vector_store %arg3[%c1_7, %c0_8, %c0_9], %13 {strides = array<i32>} : memref<4x8x128xf32, #tpu.memory_space<vmem>>, vector<1x8x128xf32>,
    %c0_10 = arith.constant 0 : index
    %c1_11 = arith.constant 1 : index
    %14 = memref.load %arg1[%c0_10, %c1_11] : memref<2x3xf32, #tpu.memory_space<smem>>
    %15 = vector.broadcast %14 : f32 to vector<8x128xf32>
    %16 = arith.mulf %10, %15 : vector<8x128xf32>
    %c1_12 = arith.constant 1 : index
    %c1_13 = arith.constant 1 : index
    %17 = memref.load %arg1[%c1_12, %c1_13] : memref<2x3xf32, #tpu.memory_space<smem>>
    %18 = vector.broadcast %17 : f32 to vector<8x128xf32>
    %19 = arith.addf %16, %18 : vector<8x128xf32>
    %20 = math.sin %19 : vector<8x128xf32>
    %c2 = arith.constant 2 : index
    %c0_14 = arith.constant 0 : index
    %c0_15 = arith.constant 0 : index
    %21 = vector.load %arg3[%c2, %c0_14, %c0_15] : memref<4x8x128xf32, #tpu.memory_space<vmem>>, vector<1x8x128xf32>
    %22 = vector.shape_cast %21 : vector<1x8x128xf32> to vector<8x128xf32>
    %23 = vector.shape_cast %20 : vector<8x128xf32> to vector<1x8x128xf32>
    tpu.vector_store %arg3[%c2, %c0_14, %c0_15], %23 {strides = array<i32>} : memref<4x8x128xf32, #tpu.memory_space<vmem>>, vector<1x8x128xf32>,
    %c0_16 = arith.constant 0 : index
    %c2_17 = arith.constant 2 : index
    %24 = memref.load %arg1[%c0_16, %c2_17] : memref<2x3xf32, #tpu.memory_space<smem>>
    %25 = vector.broadcast %24 : f32 to vector<8x128xf32>
    %26 = arith.mulf %20, %25 : vector<8x128xf32>
    %c1_18 = arith.constant 1 : index
    %c2_19 = arith.constant 2 : index
    %27 = memref.load %arg1[%c1_18, %c2_19] : memref<2x3xf32, #tpu.memory_space<smem>>
    %28 = vector.broadcast %27 : f32 to vector<8x128xf32>
    %29 = arith.addf %26, %28 : vector<8x128xf32>
    %30 = math.sin %29 : vector<8x128xf32>
    %c3 = arith.constant 3 : index
    %c0_20 = arith.constant 0 : index
    %c0_21 = arith.constant 0 : index
    %31 = vector.load %arg3[%c3, %c0_20, %c0_21] : memref<4x8x128xf32, #tpu.memory_space<vmem>>, vector<1x8x128xf32>
    %32 = vector.shape_cast %31 : vector<1x8x128xf32> to vector<8x128xf32>
    %33 = vector.shape_cast %30 : vector<8x128xf32> to vector<1x8x128xf32>
    tpu.vector_store %arg3[%c3, %c0_20, %c0_21], %33 {strides = array<i32>} : memref<4x8x128xf32, #tpu.memory_space<vmem>>, vector<1x8x128xf32>,
    return
  }
  func.func @transform_0(%arg0: i32) -> (i32, i32) {
    %c0_i32 = arith.constant 0 : i32
    %c0_i32_0 = arith.constant 0 : i32
    %c0_i32_1 = arith.constant 0 : i32
    return %c0_i32, %c0_i32_0 : i32, i32
  }
  func.func @transform_1(%arg0: i32) -> (i32, i32) {
    %c0_i32 = arith.constant 0 : i32
    %c0_i32_0 = arith.constant 0 : i32
    return %arg0, %c0_i32 : i32, i32
  }
  func.func @transform_2(%arg0: i32) -> (i32, i32, i32) {
    %c0_i32 = arith.constant 0 : i32
    %c0_i32_0 = arith.constant 0 : i32
    %c0_i32_1 = arith.constant 0 : i32
    return %c0_i32, %arg0, %c0_i32_0 : i32, i32, i32
  }
}

</mosaic_0001>

<llo_original>
// kernel: tpu_custom_call.1
$region0: #{tpu_custom_call.1}
  #allocation0 [shape = 'u32[]', space=smem, size = 0x4, offset = 0x4, fixed_abs, tag = 'smem constant byte address 0x4 - core index']
  #allocation1 [shape = 'u32[144,128]{1,0:T(1,128)}', space=vmem, size = 0x12000, scoped, tag = 'internal scratch']
  %s0 = inlined_call_operand.hbm [shape: f32[2,3], index: 0, kind: input, shape index: {}]
  %s1 = inlined_call_operand.hbm [shape: f32[8,128], index: 1, kind: input, shape index: {}]
  %s2 = inlined_call_operand.hbm [shape: f32[4,8,128], index: 2, kind: output, shape index: {}]
  %s3 = sld [smem:[#allocation0]]
  $region26: #{tpu_custom_call.1} parent=0
    _
  %s5 = ssub.s32 1, %s3
  %s6 = scalar_select 0, %s5, %s3
  $region1: #{tpu_custom_call.1} parent=0
    #allocation2 [shape = 'u8[1024]{0}', space=smem, size = 0x400, scoped, tag = 'input window, operand 0, single buffered']
    #allocation3 [shape = 's32[1]{0}', space=sflag, size = 0x4, scoped, tag = 'scoped memory for tpu_custom_call.1']
    #allocation4 [shape = 's32[1]{0}', space=sflag, size = 0x4, scoped, tag = 'scoped memory for tpu_custom_call.1']
    #allocation5 [shape = 's32[1]{0}', space=sflag, size = 0x4, scoped, tag = 'scoped memory for tpu_custom_call.1']
    #allocation6 [shape = 'u8[4096]{0}', space=vmem, size = 0x1000, scoped, tag = 'input window, operand 1, single buffered']
    #allocation7 [shape = 'u8[16384]{0}', space=vmem, size = 0x4000, scoped, tag = 'output window, operand 0, single buffered']
    %7 = vsyncpa [#allocation5], 0
    %8 = vsyncpa [#allocation3], 0
    %9 = vsyncpa [#allocation4], 0
    // Predicated region
    $region2: #{tpu_custom_call.1} parent=1 // pred_check
      _
    $region3: #{tpu_custom_call.1} parent=1 // pred_check_branch
      %11 = sbr.rel (0) target = $region5
    $region4: #{tpu_custom_call.1} parent=1 // pred_region
      %s13 = ssub.s32 32, 32
      %14 = vsyncadd [#allocation5], %s13
      %17 = dma.hbm_to_smem %s0, 32, [#allocation2], [#allocation5]
    $region5: #{tpu_custom_call.1} parent=1 // pred_fallthru
      _
    // Predicated region
    $region6: #{tpu_custom_call.1} parent=1 // pred_check
      _
    $region7: #{tpu_custom_call.1} parent=1 // pred_check_branch
      %19 = sbr.rel (0) target = $region9
    $region8: #{tpu_custom_call.1} parent=1 // pred_region
      %s21 = ssub.s32 128, 128
      %22 = vsyncadd [#allocation3], %s21
      %s24 = sshll.u32 [#allocation6], 4
      %s25 = int_to_ptr.vmem [resolvable:$true] %s24
      %27 = dma.hbm_to_vmem [thread:$0]  %s1, 128, %s25, [#allocation3]
    $region9: #{tpu_custom_call.1} parent=1 // pred_fallthru
      _
    // Predicated region
    $region10: #{tpu_custom_call.1} parent=1 // pred_check
      _
    $region11: #{tpu_custom_call.1} parent=1 // pred_check_branch
      %29 = sbr.rel (0) target = $region13
    $region12: #{tpu_custom_call.1} parent=1 // pred_region
      %30 = dma.done [#allocation5], 32
    $region13: #{tpu_custom_call.1} parent=1 // pred_fallthru
      _
    // Predicated region
    $region14: #{tpu_custom_call.1} parent=1 // pred_check
      _
    $region15: #{tpu_custom_call.1} parent=1 // pred_check_branch
      %32 = sbr.rel (0) target = $region17
    $region16: #{tpu_custom_call.1} parent=1 // pred_region
      %33 = dma.done [#allocation3], 128
    $region17: #{tpu_custom_call.1} parent=1 // pred_fallthru
      _
    %34 = sfence
    %v35 = vld [vmem:[#allocation6] sm:$0xff]
    %36 = vst [vmem:[#allocation7] sm:$0xff] %v35
    %s37 = sld [smem:[#allocation2]]
    %v38 = vstv %s37
    %v39 = vmul.f32 %v35, %v38
    %s40 = sld [smem:[#allocation2 + $0x80]]
    %v41 = vstv %s40
    %v42 = vadd.f32 %v39, %v41
    %v43 = vand.u32 2147483647, %v42
    %vm44 = vcmp.le.f32.partialorder %v43, 0.7853982
    %vm45 = vcmp.lt.s32.totalorder %v42, 0
    %v46 = vand.u32 %v42, 2139095040
    %v47 = vshrl.u32 %v46, 23
    %v48 = vsub.s32 %v47, 127
    %v49 = vand.u32 2147483647, %v42
    %v50 = vand.u32 %v49, 8388607
    %v51 = vor.u32 %v50, 8388608
    %v52 = vsub.s32 0, %v51
    %v53 = vadd.s32 %v48, 1
    %vm54 = vcmp.gt.s32.totalorder %v53, 0
    %v55 = vsel %vm54, %v53, 0
    %v56 = vshrl.u32 %v55, 5
    %v57 = vand.u32 %v55, 31
    %v58 = vsub.s32 32, %v57
    %v59 = vshrl.u32 683565275, %v58
    %v60 = vshll.u32 683565275, %v57
    %v61 = vshrl.u32 2475754826, %v58
    %v62 = vor.u32 %v60, %v61
    %v63 = vshll.u32 2475754826, %v57
    %v64 = vshrl.u32 2131351028, %v58
    %v65 = vor.u32 %v63, %v64
    %v66 = vshll.u32 2131351028, %v57
    %v67 = vshrl.u32 2102212464, %v58
    %v68 = vor.u32 %v66, %v67
    %v69 = vshll.u32 2102212464, %v57
    %v70 = vshrl.u32 920167782, %v58
    %v71 = vor.u32 %v69, %v70
    %v72 = vshll.u32 920167782, %v57
    %v73 = vshrl.u32 1326507024, %v58
    %v74 = vor.u32 %v72, %v73
    %vm75 = vcmp.lt.s32.totalorder %v56, 1
    %vm76 = vcmp.lt.s32.totalorder %v56, 2
    %vm77 = vcmp.lt.s32.totalorder %v56, 3
    %vm78 = vcmp.lt.s32.totalorder %v56, 4
    %v79 = vsel %vm75, %v59, %v62
    %v80 = vsel %vm78, %v68, 2102212464
    %v81 = vsel %vm77, %v65, %v80
    %v82 = vsel %vm76, %v79, %v81
    %v83 = vsel %vm75, %v62, %v65
    %v84 = vsel %vm78, %v71, 920167782
    %v85 = vsel %vm77, %v68, %v84
    %v86 = vsel %vm76, %v83, %v85
    %v87 = vsel %vm75, %v65, %v68
    %v88 = vsel %vm78, %v74, 1326507024
    %v89 = vsel %vm77, %v71, %v88
    %v90 = vsel %vm76, %v87, %v89
    %v91 = vshll.u32 %v51, 8
    %v92 = vmul.u32.u64.compose %v91, %v90
    %v93 = vextract.low.u32 %v92
    %v94 = vextract.high.u32 %v92
    %v95 = vmul.u32.u64.compose %v91, %v86
    %v96 = vextract.low.u32 %v95
    %v97 = vextract.high.u32 %v95
    %v98 = vmul.u32 %v91, %v82
    %v99 = vadd.s32 %v94, %v96
    %vm100 = vc.u32 %v94, %v96
    %v101 = vadd.s32 %v97, 1
    %v102 = vsel %vm100, %v101, %v97
    %v103 = vadd.s32 %v98, %v102
    %v104 = vadd.s32 %v103, 536870912
    %v105 = vshrl.u32 %v104, 30
    %v106 = vshll.u32 %v105, 30
    %v107 = vsub.s32 %v103, %v106
    %vm108 = vcmp.lt.s32.totalorder %v107, 0
    %v109 = vsub.s32 0, %v107
    %v110 = vsel %vm108, %v109, %v107
    %v111 = vclz %v110
    %v112 = vsub.s32 %v111, 2
    %vm113 = vcmp.gt.s32.totalorder 0, %v112
    %v114 = vsel %vm113, 0, %v112
    %v115 = vsub.s32 32, %v114
    %v116 = vshll.u32 %v107, %v114
    %v117 = vshrl.u32 %v99, %v115
    %v118 = vor.u32 %v116, %v117
    %v119 = vsub.s32 4294967266, %v114
    %v120 = vadd.s32 %v119, 127
    %v121 = vshll.u32 %v120, 23
    %v122 = vor.u32 4788187, %v121
    %v123 = vand.u32 2147483647, %v122
    %v125 = vcvt.s32.f32 %v118
    %v126 = vmul.f32 %v125, %v123
    %v127 = vxor.u32 %v126, 2147483648
    %v128 = vsel %vm45, %v127, %v126
    %v129 = vsub.s32 4, %v105
    %v130 = vsel %vm45, %v129, %v105
    %v131 = vsel %vm44, %v42, %v128
    %v132 = vsel %vm44, 0, %v130
    %v133 = vcosq.f32.pop %v131
    %v134 = vsinq.f32.pop %v131
    %vm135 = vweird.f32 %v42
    %v136 = vadd.s32 %v132, 3
    %v137 = vand.u32 %v136, 3
    %vm138 = vcmp.lt.s32.totalorder %v137, 2
    %vm139 = vcmp.eq.s32.totalorder %v137, 0
    %v140 = vxor.u32 %v134, 2147483648
    %v141 = vsel %vm139, %v133, %v140
    %vm142 = vcmp.eq.s32.totalorder %v137, 2
    %v143 = vxor.u32 %v133, 2147483648
    %v144 = vsel %vm142, %v143, %v134
    %v145 = vsel %vm138, %v141, %v144
    %v146 = vsel %vm135, nan, %v145
    %s147 = scalar_lea.vmem [#allocation7], 8
    %148 = vst [vmem:[%s147] sm:$0xff] %v146
    %s149 = sld [smem:[#allocation2 + $0x1]]
    %v150 = vstv %s149
    %v151 = vmul.f32 %v146, %v150
    %s152 = sld [smem:[#allocation2 + $0x81]]
    %v153 = vstv %s152
    %v154 = vadd.f32 %v151, %v153
    %v155 = vand.u32 2147483647, %v154
    %vm156 = vcmp.le.f32.partialorder %v155, 0.7853982
    %vm157 = vcmp.lt.s32.totalorder %v154, 0
    %v158 = vand.u32 %v154, 2139095040
    %v159 = vshrl.u32 %v158, 23
    %v160 = vsub.s32 %v159, 127
    %v161 = vand.u32 2147483647, %v154
    %v162 = vand.u32 %v161, 8388607
    %v163 = vor.u32 %v162, 8388608
    %v164 = vsub.s32 0, %v163
    %v165 = vadd.s32 %v160, 1
    %vm166 = vcmp.gt.s32.totalorder %v165, 0
    %v167 = vsel %vm166, %v165, 0
    %v168 = vshrl.u32 %v167, 5
    %v169 = vand.u32 %v167, 31
    %v170 = vsub.s32 32, %v169
    %v171 = vshrl.u32 683565275, %v170
    %v172 = vshll.u32 683565275, %v169
    %v173 = vshrl.u32 2475754826, %v170
    %v174 = vor.u32 %v172, %v173
    %v175 = vshll.u32 2475754826, %v169
    %v176 = vshrl.u32 2131351028, %v170
    %v177 = vor.u32 %v175, %v176
    %v178 = vshll.u32 2131351028, %v169
    %v179 = vshrl.u32 2102212464, %v170
    %v180 = vor.u32 %v178, %v179
    %v181 = vshll.u32 2102212464, %v169
    %v182 = vshrl.u32 920167782, %v170
    %v183 = vor.u32 %v181, %v182
    %v184 = vshll.u32 920167782, %v169
    %v185 = vshrl.u32 1326507024, %v170
    %v186 = vor.u32 %v184, %v185
    %vm187 = vcmp.lt.s32.totalorder %v168, 1
    %vm188 = vcmp.lt.s32.totalorder %v168, 2
    %vm189 = vcmp.lt.s32.totalorder %v168, 3
    %vm190 = vcmp.lt.s32.totalorder %v168, 4
    %v191 = vsel %vm187, %v171, %v174
    %v192 = vsel %vm190, %v180, 2102212464
    %v193 = vsel %vm189, %v177, %v192
    %v194 = vsel %vm188, %v191, %v193
    %v195 = vsel %vm187, %v174, %v177
    %v196 = vsel %vm190, %v183, 920167782
    %v197 = vsel %vm189, %v180, %v196
    %v198 = vsel %vm188, %v195, %v197
    %v199 = vsel %vm187, %v177, %v180
    %v200 = vsel %vm190, %v186, 1326507024
    %v201 = vsel %vm189, %v183, %v200
    %v202 = vsel %vm188, %v199, %v201
    %v203 = vshll.u32 %v163, 8
    %v204 = vmul.u32.u64.compose %v203, %v202
    %v205 = vextract.low.u32 %v204
    %v206 = vextract.high.u32 %v204
    %v207 = vmul.u32.u64.compose %v203, %v198
    %v208 = vextract.low.u32 %v207
    %v209 = vextract.high.u32 %v207
    %v210 = vmul.u32 %v203, %v194
    %v211 = vadd.s32 %v206, %v208
    %vm212 = vc.u32 %v206, %v208
    %v213 = vadd.s32 %v209, 1
    %v214 = vsel %vm212, %v213, %v209
    %v215 = vadd.s32 %v210, %v214
    %v216 = vadd.s32 %v215, 536870912
    %v217 = vshrl.u32 %v216, 30
    %v218 = vshll.u32 %v217, 30
    %v219 = vsub.s32 %v215, %v218
    %vm220 = vcmp.lt.s32.totalorder %v219, 0
    %v221 = vsub.s32 0, %v219
    %v222 = vsel %vm220, %v221, %v219
    %v223 = vclz %v222
    %v224 = vsub.s32 %v223, 2
    %vm225 = vcmp.gt.s32.totalorder 0, %v224
    %v226 = vsel %vm225, 0, %v224
    %v227 = vsub.s32 32, %v226
    %v228 = vshll.u32 %v219, %v226
    %v229 = vshrl.u32 %v211, %v227
    %v230 = vor.u32 %v228, %v229
    %v231 = vsub.s32 4294967266, %v226
    %v232 = vadd.s32 %v231, 127
    %v233 = vshll.u32 %v232, 23
    %v234 = vor.u32 4788187, %v233
    %v235 = vand.u32 2147483647, %v234
    %v237 = vcvt.s32.f32 %v230
    %v238 = vmul.f32 %v237, %v235
    %v239 = vxor.u32 %v238, 2147483648
    %v240 = vsel %vm157, %v239, %v238
    %v241 = vsub.s32 4, %v217
    %v242 = vsel %vm157, %v241, %v217
    %v243 = vsel %vm156, %v154, %v240
    %v244 = vsel %vm156, 0, %v242
    %v245 = vcosq.f32.pop %v243
    %v246 = vsinq.f32.pop %v243
    %vm247 = vweird.f32 %v154
    %v248 = vadd.s32 %v244, 3
    %v249 = vand.u32 %v248, 3
    %vm250 = vcmp.lt.s32.totalorder %v249, 2
    %vm251 = vcmp.eq.s32.totalorder %v249, 0
    %v252 = vxor.u32 %v246, 2147483648
    %v253 = vsel %vm251, %v245, %v252
    %vm254 = vcmp.eq.s32.totalorder %v249, 2
    %v255 = vxor.u32 %v245, 2147483648
    %v256 = vsel %vm254, %v255, %v246
    %v257 = vsel %vm250, %v253, %v256
    %v258 = vsel %vm247, nan, %v257
    %s259 = scalar_lea.vmem [#allocation7], 16
    %260 = vst [vmem:[%s259] sm:$0xff] %v258
    %s261 = sld [smem:[#allocation2 + $0x2]]
    %v262 = vstv %s261
    %v263 = vmul.f32 %v258, %v262
    %s264 = sld [smem:[#allocation2 + $0x82]]
    %v265 = vstv %s264
    %v266 = vadd.f32 %v263, %v265
    %v267 = vand.u32 2147483647, %v266
    %vm268 = vcmp.le.f32.partialorder %v267, 0.7853982
    %vm269 = vcmp.lt.s32.totalorder %v266, 0
    %v270 = vand.u32 %v266, 2139095040
    %v271 = vshrl.u32 %v270, 23
    %v272 = vsub.s32 %v271, 127
    %v273 = vand.u32 2147483647, %v266
    %v274 = vand.u32 %v273, 8388607
    %v275 = vor.u32 %v274, 8388608
    %v276 = vsub.s32 0, %v275
    %v277 = vadd.s32 %v272, 1
    %vm278 = vcmp.gt.s32.totalorder %v277, 0
    %v279 = vsel %vm278, %v277, 0
    %v280 = vshrl.u32 %v279, 5
    %v281 = vand.u32 %v279, 31
    %v282 = vsub.s32 32, %v281
    %v283 = vshrl.u32 683565275, %v282
    %v284 = vshll.u32 683565275, %v281
    %v285 = vshrl.u32 2475754826, %v282
    %v286 = vor.u32 %v284, %v285
    %v287 = vshll.u32 2475754826, %v281
    %v288 = vshrl.u32 2131351028, %v282
    %v289 = vor.u32 %v287, %v288
    %v290 = vshll.u32 2131351028, %v281
    %v291 = vshrl.u32 2102212464, %v282
    %v292 = vor.u32 %v290, %v291
    %v293 = vshll.u32 2102212464, %v281
    %v294 = vshrl.u32 920167782, %v282
    %v295 = vor.u32 %v293, %v294
    %v296 = vshll.u32 920167782, %v281
    %v297 = vshrl.u32 1326507024, %v282
    %v298 = vor.u32 %v296, %v297
    %vm299 = vcmp.lt.s32.totalorder %v280, 1
    %vm300 = vcmp.lt.s32.totalorder %v280, 2
    %vm301 = vcmp.lt.s32.totalorder %v280, 3
    %vm302 = vcmp.lt.s32.totalorder %v280, 4
    %v303 = vsel %vm299, %v283, %v286
    %v304 = vsel %vm302, %v292, 2102212464
    %v305 = vsel %vm301, %v289, %v304
    %v306 = vsel %vm300, %v303, %v305
    %v307 = vsel %vm299, %v286, %v289
    %v308 = vsel %vm302, %v295, 920167782
    %v309 = vsel %vm301, %v292, %v308
    %v310 = vsel %vm300, %v307, %v309
    %v311 = vsel %vm299, %v289, %v292
    %v312 = vsel %vm302, %v298, 1326507024
    %v313 = vsel %vm301, %v295, %v312
    %v314 = vsel %vm300, %v311, %v313
    %v315 = vshll.u32 %v275, 8
    %v316 = vmul.u32.u64.compose %v315, %v314
    %v317 = vextract.low.u32 %v316
    %v318 = vextract.high.u32 %v316
    %v319 = vmul.u32.u64.compose %v315, %v310
    %v320 = vextract.low.u32 %v319
    %v321 = vextract.high.u32 %v319
    %v322 = vmul.u32 %v315, %v306
    %v323 = vadd.s32 %v318, %v320
    %vm324 = vc.u32 %v318, %v320
    %v325 = vadd.s32 %v321, 1
    %v326 = vsel %vm324, %v325, %v321
    %v327 = vadd.s32 %v322, %v326
    %v328 = vadd.s32 %v327, 536870912
    %v329 = vshrl.u32 %v328, 30
    %v330 = vshll.u32 %v329, 30
    %v331 = vsub.s32 %v327, %v330
    %vm332 = vcmp.lt.s32.totalorder %v331, 0
    %v333 = vsub.s32 0, %v331
    %v334 = vsel %vm332, %v333, %v331
    %v335 = vclz %v334
    %v336 = vsub.s32 %v335, 2
    %vm337 = vcmp.gt.s32.totalorder 0, %v336
    %v338 = vsel %vm337, 0, %v336
    %v339 = vsub.s32 32, %v338
    %v340 = vshll.u32 %v331, %v338
    %v341 = vshrl.u32 %v323, %v339
    %v342 = vor.u32 %v340, %v341
    %v343 = vsub.s32 4294967266, %v338
    %v344 = vadd.s32 %v343, 127
    %v345 = vshll.u32 %v344, 23
    %v346 = vor.u32 4788187, %v345
    %v347 = vand.u32 2147483647, %v346
    %v349 = vcvt.s32.f32 %v342
    %v350 = vmul.f32 %v349, %v347
    %v351 = vxor.u32 %v350, 2147483648
    %v352 = vsel %vm269, %v351, %v350
    %v353 = vsub.s32 4, %v329
    %v354 = vsel %vm269, %v353, %v329
    %v355 = vsel %vm268, %v266, %v352
    %v356 = vsel %vm268, 0, %v354
    %v357 = vcosq.f32.pop %v355
    %v358 = vsinq.f32.pop %v355
    %vm359 = vweird.f32 %v266
    %v360 = vadd.s32 %v356, 3
    %v361 = vand.u32 %v360, 3
    %vm362 = vcmp.lt.s32.totalorder %v361, 2
    %vm363 = vcmp.eq.s32.totalorder %v361, 0
    %v364 = vxor.u32 %v358, 2147483648
    %v365 = vsel %vm363, %v357, %v364
    %vm366 = vcmp.eq.s32.totalorder %v361, 2
    %v367 = vxor.u32 %v357, 2147483648
    %v368 = vsel %vm366, %v367, %v358
    %v369 = vsel %vm362, %v365, %v368
    %v370 = vsel %vm359, nan, %v369
    %s371 = scalar_lea.vmem [#allocation7], 24
    %372 = vst [vmem:[%s371] sm:$0xff] %v370
    // Predicated region
    $region18: #{tpu_custom_call.1} parent=1 // pred_check
      _
    $region19: #{tpu_custom_call.1} parent=1 // pred_check_branch
      %374 = sbr.rel (0) target = $region21
    $region20: #{tpu_custom_call.1} parent=1 // pred_region
      %s376 = ssub.s32 512, 512
      %377 = vsyncadd [#allocation4], %s376
      %s378 = sshll.u32 [#allocation7], 4
      %s379 = int_to_ptr.vmem [resolvable:$true] %s378
      %384 = dma.vmem_to_hbm [thread:$0]  %s379, 512, %s2, [#allocation4], 128, 128, 8
    $region21: #{tpu_custom_call.1} parent=1 // pred_fallthru
      _
    // Predicated region
    $region22: #{tpu_custom_call.1} parent=1 // pred_check
      _
    $region23: #{tpu_custom_call.1} parent=1 // pred_check_branch
      %386 = sbr.rel (0) target = $region25
    $region24: #{tpu_custom_call.1} parent=1 // pred_region
      %387 = dma.done [#allocation4], 512
    $region25: #{tpu_custom_call.1} parent=1 // pred_fallthru
      _
    %388 = vsyncpa [#allocation3], 1
    %389 = vsyncpa [#allocation4], 1
    %390 = vsyncpa [#allocation5], 1

</llo_original>
